<compile_context>
chip_gen: v5e
topology: v5e:2x2
jax: 0.10.0
libtpu: 0.0.40
codegen_flags: <defaults>
</compile_context>

<pallas_src>
import jax
import jax.numpy as jnp
from jax import lax
from jax.experimental import pallas as pl
from jax.experimental.pallas import tpu as pltpu

CONV_CH = (16, 16)


def vote_kernel(pts_ref, feats_ref, w1_ref, b1_ref, w2_ref, b2_ref,
                wox_ref, box_ref, wof_ref, bof_ref,
                vote_pts_ref, vote_feats_ref, offset_ref):
    # All refs are channel-major (channels on sublanes, points on lanes):
    #   pts_ref:   (3, TN)       feats_ref: (C, TN)
    #   w1: (H1, C)  b1: (H1, 1)   (BN already folded in)
    #   w2: (H2, H1) b2: (H2, 1)
    #   wox: (3, H2) box: (3, 1)   wof: (C, H2) bof: (C, 1)
    x = feats_ref[...]            # (C, TN)
    pts = pts_ref[...]            # (3, TN)

    # vote_conv[0]: 1x1 conv + BN(folded) + ReLU -> (H1, TN)
    h = jnp.dot(w1_ref[...], x, preferred_element_type=jnp.float32) + b1_ref[...]
    h = jnp.maximum(h, 0.0)
    # vote_conv[1]: 1x1 conv + BN(folded) + ReLU -> (H2, TN)
    h = jnp.dot(w2_ref[...], h, preferred_element_type=jnp.float32) + b2_ref[...]
    h = jnp.maximum(h, 0.0)
    # conv_out split into xyz offset and residual features.
    offset = jnp.dot(wox_ref[...], h, preferred_element_type=jnp.float32) + box_ref[...]   # (3, TN)
    res = jnp.dot(wof_ref[...], h, preferred_element_type=jnp.float32) + bof_ref[...]      # (C, TN)

    vote_pts_ref[...] = pts + offset          # (3, TN), lane-dense
    offset_ref[...] = offset                  # (3, TN), lane-dense

    vf = x + res                              # (C, TN)
    # L2 norm over channels (PyTorch: torch.norm(vote_feats, p=2, dim=1)).
    inv_norm = lax.rsqrt(jnp.sum(vf * vf, axis=0, keepdims=True))   # (1, TN), EUP
    vote_feats_ref[...] = vf * inv_norm       # (C, TN), lane-dense


def _lane_tile(n):
    """Largest lane tile (multiple of 128, <= 2048) dividing N; else full N."""
    if n <= 2048:
        return n
    for t in (2048, 1024, 512, 256, 128):
        if n % t == 0:
            return t
    return n


def vote_module_forward(seed_points, seed_feats, params):
    """seed_points: (B, N, 3); seed_feats: (B, C, N) — PyTorch conventions."""
    B, C, N = seed_feats.shape
    w1, b1, w2, b2, wox, box, wof, bof = params
    H1, H2 = w1.shape[0], w2.shape[0]

    # Tiny transpose (3*N floats per batch) so the whole kernel is channel-major.
    pts_cm = jnp.transpose(seed_points, (0, 2, 1))       # (B, 3, N)

    TN = _lane_tile(N)
    nt = N // TN
    grid = (B, nt)

    def bx(b, n):          # batched inputs/outputs, tiled over the lane axis
        return (b, 0, n)

    def const(b, n):       # weights/biases: fetched once, stay VMEM-resident
        return (0, 0)

    in_specs = [
        pl.BlockSpec((pl.Squeezed(), 3, TN), bx),
        pl.BlockSpec((pl.Squeezed(), C, TN), bx),
        pl.BlockSpec((H1, C), const),
        pl.BlockSpec((H1, 1), const),
        pl.BlockSpec((H2, H1), const),
        pl.BlockSpec((H2, 1), const),
        pl.BlockSpec((3, H2), const),
        pl.BlockSpec((3, 1), const),
        pl.BlockSpec((C, H2), const),
        pl.BlockSpec((C, 1), const),
    ]
    out_specs = [
        pl.BlockSpec((pl.Squeezed(), 3, TN), bx),
        pl.BlockSpec((pl.Squeezed(), C, TN), bx),
        pl.BlockSpec((pl.Squeezed(), 3, TN), bx),
    ]
    out_shape = [
        jax.ShapeDtypeStruct((B, 3, N), jnp.float32),     # vote_points (channel-major)
        jax.ShapeDtypeStruct((B, C, N), jnp.float32),     # vote_feats (already NCL)
        jax.ShapeDtypeStruct((B, 3, N), jnp.float32),     # offset (already (B,3,N))
    ]

    vote_pts_cm, vote_feats, offset = pl.pallas_call(
        vote_kernel,
        out_shape=out_shape,
        grid_spec=pltpu.PrefetchScalarGridSpec(
            num_scalar_prefetch=0,
            grid=grid,
            in_specs=in_specs,
            out_specs=out_specs,
        ),
        compiler_params=pltpu.CompilerParams(
            dimension_semantics=("parallel", "parallel")),
    )(pts_cm, seed_feats, w1, b1, w2, b2, wox, box, wof, bof)

    # PyTorch outputs: vote_points (B, M, 3), vote_feats (B, C, M), offset (B, 3, M).
    vote_points = jnp.transpose(vote_pts_cm, (0, 2, 1))   # tiny tensor
    return vote_points, vote_feats, offset


def fold_bn(W, b, gamma, beta, mean, var, eps=1e-5):
    """Fold eval-mode BatchNorm1d into a 1x1 Conv1d. W: (out, in), b: (out,)."""
    scale = gamma / jnp.sqrt(var + eps)
    return W * scale[:, None], (b - mean) * scale + beta


def init_params(key, in_channels):
    """Deterministic parameter init matching VoteModule's layer shapes."""
    C = in_channels
    H1, H2 = CONV_CH
    OUT = 3 + C  # (3 + in_channels) * vote_per_seed, vote_per_seed = 1
    ks = jax.random.split(key, 9)

    def u(k, shape, scale):
        return jax.random.uniform(k, shape, jnp.float32, -scale, scale)

    # Conv1d weights (out, in) (kernel size 1 squeezed) + biases.
    W1, b1 = u(ks[0], (H1, C), 0.2), u(ks[1], (H1,), 0.2)
    W2, b2 = u(ks[2], (H2, H1), 0.2), u(ks[3], (H2,), 0.2)
    Wo, bo = u(ks[4], (OUT, H2), 0.2), u(ks[5], (OUT,), 0.2)

    # BN1d (eval-mode) params: gamma, beta, running_mean, running_var.
    g1 = 1.0 + 0.1 * jax.random.normal(ks[6], (H1,), jnp.float32)
    be1 = 0.05 * jax.random.normal(ks[7], (H1,), jnp.float32)
    m1 = 0.1 * jax.random.normal(ks[8], (H1,), jnp.float32)
    v1 = jnp.ones((H1,), jnp.float32) * 0.9
    g2 = jnp.ones((H2,), jnp.float32) * 1.1
    be2 = jnp.ones((H2,), jnp.float32) * -0.02
    m2 = jnp.zeros((H2,), jnp.float32)
    v2 = jnp.ones((H2,), jnp.float32) * 1.2

    W1f, b1f = fold_bn(W1, b1, g1, be1, m1, v1)
    W2f, b2f = fold_bn(W2, b2, g2, be2, m2, v2)

    # Channel-major kernel wants (out, in) weights (as in PyTorch) and (out, 1)
    # bias columns that broadcast over the lane (point) axis.  conv_out is split
    # into its xyz-offset and residual-feature halves.
    return (W1f, b1f[:, None], W2f, b2f[:, None],
            Wo[:3], bo[:3, None], Wo[3:], bo[3:, None])


def reference_forward(seed_points, seed_feats, params):
    """Pure-JAX reference mirroring the PyTorch forward (for sanity check)."""
    w1, b1, w2, b2, wox, box, wof, bof = params
    x = seed_feats                                                    # (B, C, N)
    h = jnp.maximum(jnp.einsum('hc,bcn->bhn', w1, x) + b1[None], 0.0)
    h = jnp.maximum(jnp.einsum('hc,bcn->bhn', w2, h) + b2[None], 0.0)
    offset = jnp.einsum('oc,bcn->bon', wox, h) + box[None]            # (B, 3, N)
    res = jnp.einsum('oc,bcn->bon', wof, h) + bof[None]               # (B, C, N)
    vote_points = seed_points + jnp.transpose(offset, (0, 2, 1))      # (B, N, 3)
    vf = x + res
    vf = vf / jnp.linalg.norm(vf, axis=1, keepdims=True)              # (B, C, N)
    return vote_points, vf, offset


if __name__ == "__main__":
    B, C, N = 2, 32, 128  # batch, in_channels, num_seed
    key = jax.random.PRNGKey(0)
    k_pts, k_feat, k_param = jax.random.split(key, 3)

    seed_points = jax.random.normal(k_pts, (B, N, 3), jnp.float32)
    seed_feats = jax.random.normal(k_feat, (B, C, N), jnp.float32)
    params = init_params(k_param, C)

    vote_points, vote_feats, offset = vote_module_forward(
        seed_points, seed_feats, params)
    jax.block_until_ready((vote_points, vote_feats, offset))

    # sanity check against pure-JAX reference
    ref_pts, ref_feats, ref_off = reference_forward(seed_points, seed_feats, params)
    assert vote_points.shape == (B, N, 3)
    assert vote_feats.shape == (B, C, N)
    assert offset.shape == (B, 3, N)
    assert jnp.allclose(vote_points, ref_pts, atol=1e-4, rtol=1e-4)
    assert jnp.allclose(vote_feats, ref_feats, atol=1e-4, rtol=1e-4)
    assert jnp.allclose(offset, ref_off, atol=1e-4, rtol=1e-4)

    print("KERNEL_OK")
</pallas_src>

<mosaic_0001>
module attributes {stable_mosaic.version = 11 : i64} {
  func.func @vote_kernel(%arg0: i32, %arg1: i32, %arg2: memref<1x3x128xf32, #tpu.memory_space<vmem>>, %arg3: memref<1x32x128xf32, #tpu.memory_space<vmem>>, %arg4: memref<16x32xf32, #tpu.memory_space<vmem>>, %arg5: memref<16x1xf32, #tpu.memory_space<vmem>>, %arg6: memref<16x16xf32, #tpu.memory_space<vmem>>, %arg7: memref<16x1xf32, #tpu.memory_space<vmem>>, %arg8: memref<3x16xf32, #tpu.memory_space<vmem>>, %arg9: memref<3x1xf32, #tpu.memory_space<vmem>>, %arg10: memref<32x16xf32, #tpu.memory_space<vmem>>, %arg11: memref<32x1xf32, #tpu.memory_space<vmem>>, %arg12: memref<1x3x128xf32, #tpu.memory_space<vmem>>, %arg13: memref<1x32x128xf32, #tpu.memory_space<vmem>>, %arg14: memref<1x3x128xf32, #tpu.memory_space<vmem>>) attributes {dimension_semantics = [#tpu.dimension_semantics<parallel>, #tpu.dimension_semantics<parallel>], iteration_bounds = array<i64: 2, 1>, scalar_prefetch = 0 : i64, scratch_operands = 0 : i64, tpu.core_type = #tpu.core_type<tc>, window_params = [{transform_indices = @transform_0, window_bounds = array<i64: 1, 3, 128>}, {transform_indices = @transform_1, window_bounds = array<i64: 1, 32, 128>}, {pipeline_mode = #tpu.pipeline_mode<synchronous>, transform_indices = @transform_2, window_bounds = array<i64: 16, 32>}, {pipeline_mode = #tpu.pipeline_mode<synchronous>, transform_indices = @transform_3, window_bounds = array<i64: 16, 1>}, {pipeline_mode = #tpu.pipeline_mode<synchronous>, transform_indices = @transform_4, window_bounds = array<i64: 16, 16>}, {pipeline_mode = #tpu.pipeline_mode<synchronous>, transform_indices = @transform_5, window_bounds = array<i64: 16, 1>}, {pipeline_mode = #tpu.pipeline_mode<synchronous>, transform_indices = @transform_6, window_bounds = array<i64: 3, 16>}, {pipeline_mode = #tpu.pipeline_mode<synchronous>, transform_indices = @transform_7, window_bounds = array<i64: 3, 1>}, {pipeline_mode = #tpu.pipeline_mode<synchronous>, transform_indices = @transform_8, window_bounds = array<i64: 32, 16>}, {pipeline_mode = #tpu.pipeline_mode<synchronous>, transform_indices = @transform_9, window_bounds = array<i64: 32, 1>}, {transform_indices = @transform_10, window_bounds = array<i64: 1, 3, 128>}, {transform_indices = @transform_11, window_bounds = array<i64: 1, 32, 128>}, {transform_indices = @transform_12, window_bounds = array<i64: 1, 3, 128>}]} {
    %c0 = arith.constant 0 : index
    %c0_0 = arith.constant 0 : index
    %c0_1 = arith.constant 0 : index
    %0 = vector.load %arg3[%c0, %c0_0, %c0_1] : memref<1x32x128xf32, #tpu.memory_space<vmem>>, vector<1x32x128xf32>
    %1 = vector.shape_cast %0 : vector<1x32x128xf32> to vector<32x128xf32>
    %c0_2 = arith.constant 0 : index
    %c0_3 = arith.constant 0 : index
    %c0_4 = arith.constant 0 : index
    %2 = vector.load %arg2[%c0_2, %c0_3, %c0_4] : memref<1x3x128xf32, #tpu.memory_space<vmem>>, vector<1x3x128xf32>
    %3 = vector.shape_cast %2 : vector<1x3x128xf32> to vector<3x128xf32>
    %c0_5 = arith.constant 0 : index
    %c0_6 = arith.constant 0 : index
    %4 = vector.load %arg4[%c0_5, %c0_6] : memref<16x32xf32, #tpu.memory_space<vmem>>, vector<16x32xf32>
    %cst = arith.constant dense<0.000000e+00> : vector<16x128xf32>
    %5 = tpu.matmul %4, %1, %cst {dimension_numbers = #tpu.dot_dimension_numbers<[1], [0], [0], [1], [0, 0, 1, 1], [], []>} : vector<16x32xf32>, vector<32x128xf32>, vector<16x128xf32> -> vector<16x128xf32>
    %c0_7 = arith.constant 0 : index
    %c0_8 = arith.constant 0 : index
    %6 = vector.load %arg5[%c0_7, %c0_8] : memref<16x1xf32, #tpu.memory_space<vmem>>, vector<16x1xf32>
    %7 = vector.broadcast %6 : vector<16x1xf32> to vector<16x128xf32>
    %8 = arith.addf %5, %7 : vector<16x128xf32>
    %cst_9 = arith.constant 0.000000e+00 : f32
    %9 = vector.broadcast %cst_9 : f32 to vector<16x128xf32>
    %10 = arith.maximumf %8, %9 : vector<16x128xf32>
    %c0_10 = arith.constant 0 : index
    %c0_11 = arith.constant 0 : index
    %11 = vector.load %arg6[%c0_10, %c0_11] : memref<16x16xf32, #tpu.memory_space<vmem>>, vector<16x16xf32>
    %cst_12 = arith.constant dense<0.000000e+00> : vector<16x128xf32>
    %12 = tpu.matmul %11, %10, %cst_12 {dimension_numbers = #tpu.dot_dimension_numbers<[1], [0], [0], [1], [0, 0, 1, 1], [], []>} : vector<16x16xf32>, vector<16x128xf32>, vector<16x128xf32> -> vector<16x128xf32>
    %c0_13 = arith.constant 0 : index
    %c0_14 = arith.constant 0 : index
    %13 = vector.load %arg7[%c0_13, %c0_14] : memref<16x1xf32, #tpu.memory_space<vmem>>, vector<16x1xf32>
    %14 = vector.broadcast %13 : vector<16x1xf32> to vector<16x128xf32>
    %15 = arith.addf %12, %14 : vector<16x128xf32>
    %cst_15 = arith.constant 0.000000e+00 : f32
    %16 = vector.broadcast %cst_15 : f32 to vector<16x128xf32>
    %17 = arith.maximumf %15, %16 : vector<16x128xf32>
    %c0_16 = arith.constant 0 : index
    %c0_17 = arith.constant 0 : index
    %18 = vector.load %arg8[%c0_16, %c0_17] : memref<3x16xf32, #tpu.memory_space<vmem>>, vector<3x16xf32>
    %cst_18 = arith.constant dense<0.000000e+00> : vector<3x128xf32>
    %19 = tpu.matmul %18, %17, %cst_18 {dimension_numbers = #tpu.dot_dimension_numbers<[1], [0], [0], [1], [0, 0, 1, 1], [], []>} : vector<3x16xf32>, vector<16x128xf32>, vector<3x128xf32> -> vector<3x128xf32>
    %c0_19 = arith.constant 0 : index
    %c0_20 = arith.constant 0 : index
    %20 = vector.load %arg9[%c0_19, %c0_20] : memref<3x1xf32, #tpu.memory_space<vmem>>, vector<3x1xf32>
    %21 = vector.broadcast %20 : vector<3x1xf32> to vector<3x128xf32>
    %22 = arith.addf %19, %21 : vector<3x128xf32>
    %c0_21 = arith.constant 0 : index
    %c0_22 = arith.constant 0 : index
    %23 = vector.load %arg10[%c0_21, %c0_22] : memref<32x16xf32, #tpu.memory_space<vmem>>, vector<32x16xf32>
    %cst_23 = arith.constant dense<0.000000e+00> : vector<32x128xf32>
    %24 = tpu.matmul %23, %17, %cst_23 {dimension_numbers = #tpu.dot_dimension_numbers<[1], [0], [0], [1], [0, 0, 1, 1], [], []>} : vector<32x16xf32>, vector<16x128xf32>, vector<32x128xf32> -> vector<32x128xf32>
    %c0_24 = arith.constant 0 : index
    %c0_25 = arith.constant 0 : index
    %25 = vector.load %arg11[%c0_24, %c0_25] : memref<32x1xf32, #tpu.memory_space<vmem>>, vector<32x1xf32>
    %26 = vector.broadcast %25 : vector<32x1xf32> to vector<32x128xf32>
    %27 = arith.addf %24, %26 : vector<32x128xf32>
    %28 = arith.addf %3, %22 : vector<3x128xf32>
    %c0_26 = arith.constant 0 : index
    %c0_27 = arith.constant 0 : index
    %c0_28 = arith.constant 0 : index
    %29 = vector.load %arg12[%c0_26, %c0_27, %c0_28] : memref<1x3x128xf32, #tpu.memory_space<vmem>>, vector<1x3x128xf32>
    %30 = vector.shape_cast %29 : vector<1x3x128xf32> to vector<3x128xf32>
    %31 = vector.shape_cast %28 : vector<3x128xf32> to vector<1x3x128xf32>
    tpu.vector_store %arg12[%c0_26, %c0_27, %c0_28], %31 {strides = array<i32>} : memref<1x3x128xf32, #tpu.memory_space<vmem>>, vector<1x3x128xf32>,
    %c0_29 = arith.constant 0 : index
    %c0_30 = arith.constant 0 : index
    %c0_31 = arith.constant 0 : index
    %32 = vector.load %arg14[%c0_29, %c0_30, %c0_31] : memref<1x3x128xf32, #tpu.memory_space<vmem>>, vector<1x3x128xf32>
    %33 = vector.shape_cast %32 : vector<1x3x128xf32> to vector<3x128xf32>
    %34 = vector.shape_cast %22 : vector<3x128xf32> to vector<1x3x128xf32>
    tpu.vector_store %arg14[%c0_29, %c0_30, %c0_31], %34 {strides = array<i32>} : memref<1x3x128xf32, #tpu.memory_space<vmem>>, vector<1x3x128xf32>,
    %35 = arith.addf %1, %27 : vector<32x128xf32>
    %36 = arith.mulf %35, %35 : vector<32x128xf32>
    %cst_32 = arith.constant dense<0.000000e+00> : vector<128xf32>
    %37 = vector.multi_reduction <add>, %36, %cst_32 [0] : vector<32x128xf32> to vector<128xf32>
    %38 = vector.shape_cast %37 : vector<128xf32> to vector<1x128xf32>
    %39 = math.rsqrt %38 : vector<1x128xf32>
    %40 = vector.broadcast %39 : vector<1x128xf32> to vector<32x128xf32>
    %41 = arith.mulf %35, %40 : vector<32x128xf32>
    %c0_33 = arith.constant 0 : index
    %c0_34 = arith.constant 0 : index
    %c0_35 = arith.constant 0 : index
    %42 = vector.load %arg13[%c0_33, %c0_34, %c0_35] : memref<1x32x128xf32, #tpu.memory_space<vmem>>, vector<1x32x128xf32>
    %43 = vector.shape_cast %42 : vector<1x32x128xf32> to vector<32x128xf32>
    %44 = vector.shape_cast %41 : vector<32x128xf32> to vector<1x32x128xf32>
    tpu.vector_store %arg13[%c0_33, %c0_34, %c0_35], %44 {strides = array<i32>} : memref<1x32x128xf32, #tpu.memory_space<vmem>>, vector<1x32x128xf32>,
    return
  }
  func.func @transform_0(%arg0: i32, %arg1: i32) -> (i32, i32, i32) {
    %c0_i32 = arith.constant 0 : i32
    %c0_i32_0 = arith.constant 0 : i32
    return %arg0, %c0_i32, %arg1 : i32, i32, i32
  }
  func.func @transform_1(%arg0: i32, %arg1: i32) -> (i32, i32, i32) {
    %c0_i32 = arith.constant 0 : i32
    %c0_i32_0 = arith.constant 0 : i32
    return %arg0, %c0_i32, %arg1 : i32, i32, i32
  }
  func.func @transform_2(%arg0: i32, %arg1: i32) -> (i32, i32) {
    %c0_i32 = arith.constant 0 : i32
    %c0_i32_0 = arith.constant 0 : i32
    %c0_i32_1 = arith.constant 0 : i32
    return %c0_i32, %c0_i32_0 : i32, i32
  }
  func.func @transform_3(%arg0: i32, %arg1: i32) -> (i32, i32) {
    %c0_i32 = arith.constant 0 : i32
    %c0_i32_0 = arith.constant 0 : i32
    %c0_i32_1 = arith.constant 0 : i32
    return %c0_i32, %c0_i32_0 : i32, i32
  }
  func.func @transform_4(%arg0: i32, %arg1: i32) -> (i32, i32) {
    %c0_i32 = arith.constant 0 : i32
    %c0_i32_0 = arith.constant 0 : i32
    %c0_i32_1 = arith.constant 0 : i32
    return %c0_i32, %c0_i32_0 : i32, i32
  }
  func.func @transform_5(%arg0: i32, %arg1: i32) -> (i32, i32) {
    %c0_i32 = arith.constant 0 : i32
    %c0_i32_0 = arith.constant 0 : i32
    %c0_i32_1 = arith.constant 0 : i32
    return %c0_i32, %c0_i32_0 : i32, i32
  }
  func.func @transform_6(%arg0: i32, %arg1: i32) -> (i32, i32) {
    %c0_i32 = arith.constant 0 : i32
    %c0_i32_0 = arith.constant 0 : i32
    %c0_i32_1 = arith.constant 0 : i32
    return %c0_i32, %c0_i32_0 : i32, i32
  }
  func.func @transform_7(%arg0: i32, %arg1: i32) -> (i32, i32) {
    %c0_i32 = arith.constant 0 : i32
    %c0_i32_0 = arith.constant 0 : i32
    %c0_i32_1 = arith.constant 0 : i32
    return %c0_i32, %c0_i32_0 : i32, i32
  }
  func.func @transform_8(%arg0: i32, %arg1: i32) -> (i32, i32) {
    %c0_i32 = arith.constant 0 : i32
    %c0_i32_0 = arith.constant 0 : i32
    %c0_i32_1 = arith.constant 0 : i32
    return %c0_i32, %c0_i32_0 : i32, i32
  }
  func.func @transform_9(%arg0: i32, %arg1: i32) -> (i32, i32) {
    %c0_i32 = arith.constant 0 : i32
    %c0_i32_0 = arith.constant 0 : i32
    %c0_i32_1 = arith.constant 0 : i32
    return %c0_i32, %c0_i32_0 : i32, i32
  }
  func.func @transform_10(%arg0: i32, %arg1: i32) -> (i32, i32, i32) {
    %c0_i32 = arith.constant 0 : i32
    %c0_i32_0 = arith.constant 0 : i32
    return %arg0, %c0_i32, %arg1 : i32, i32, i32
  }
  func.func @transform_11(%arg0: i32, %arg1: i32) -> (i32, i32, i32) {
    %c0_i32 = arith.constant 0 : i32
    %c0_i32_0 = arith.constant 0 : i32
    return %arg0, %c0_i32, %arg1 : i32, i32, i32
  }
  func.func @transform_12(%arg0: i32, %arg1: i32) -> (i32, i32, i32) {
    %c0_i32 = arith.constant 0 : i32
    %c0_i32_0 = arith.constant 0 : i32
    return %arg0, %c0_i32, %arg1 : i32, i32, i32
  }
}

</mosaic_0001>

<llo_original>
// kernel: tpu_custom_call.1
$region0: #{tpu_custom_call.1}
  #allocation0 [shape = 'u32[]', space=smem, size = 0x4, offset = 0x4, fixed_abs, tag = 'smem constant byte address 0x4 - core index']
  #allocation1 [shape = 'u32[72,128]{1,0:T(1,128)}', space=vmem, size = 0x9000, scoped, tag = 'internal scratch']
  %s0 = inlined_call_operand.vmem [shape: f32[2,3,128], index: 0, kind: input, shape index: {}]
  %s1 = inlined_call_operand.vmem [shape: f32[2,32,128], index: 1, kind: input, shape index: {}]
  %s2 = inlined_call_operand.vmem [shape: f32[16,32], index: 2, kind: input, shape index: {}]
  %s3 = inlined_call_operand.vmem [shape: f32[16,1], index: 3, kind: input, shape index: {}]
  %s4 = inlined_call_operand.vmem [shape: f32[16,16], index: 4, kind: input, shape index: {}]
  %s5 = inlined_call_operand.vmem [shape: f32[16,1], index: 5, kind: input, shape index: {}]
  %s6 = inlined_call_operand.vmem [shape: f32[3,16], index: 6, kind: input, shape index: {}]
  %s7 = inlined_call_operand.vmem [shape: f32[3,1], index: 7, kind: input, shape index: {}]
  %s8 = inlined_call_operand.vmem [shape: f32[32,16], index: 8, kind: input, shape index: {}]
  %s9 = inlined_call_operand.vmem [shape: f32[32,1], index: 9, kind: input, shape index: {}]
  %s10 = inlined_call_operand.vmem [shape: f32[2,3,128], index: 10, kind: output, shape index: {0}]
  %s11 = inlined_call_operand.hbm [shape: f32[2,32,128], index: 11, kind: output, shape index: {1}]
  %s12 = inlined_call_operand.vmem [shape: f32[2,3,128], index: 12, kind: output, shape index: {2}]
  %13 = xla_tuple %s10, %s11, %s12
  %s14 = sld [smem:[#allocation0]]
  $region89: #{tpu_custom_call.1} parent=0
    _
  %s16 = ssub.s32 1, %s14
  %s17 = scalar_select 0, %s16, %s14
  $region1: #{tpu_custom_call.1} parent=0
    #allocation2 [shape = 'u8[32768]{0}', space=vmem, size = 0x8000, scoped, tag = 'output window, operand 1']
    #allocation3 [shape = 's32[2]{0}', space=sflag, size = 0x8, scoped, tag = 'scoped memory for tpu_custom_call.1']
    %18 = vsyncpa [#allocation3], 0
    %s19 = scalar_lea.sflag [#allocation3], 1
    %20 = vsyncpa %s19, 0
    loop: start=0, step=1, limit=4
    $region2: #{tpu_custom_call.1} parent=1 // loop_pre_header
      _
    $region3: #{tpu_custom_call.1} parent=1 // loop_header
      %s22 = sphi 0, %s26
      %p23 = scmp.ge.s32.totalorder %s22, 4
      %s29 = sphi 0, %s41
      %s30 = sphi 0, %s37
      %s31 = sphi 0, %s29
      %s32 = sphi 0, %s30
      %s33 = sphi 0, %s31
      %s34 = sphi 0, %s32
      %s46 = sphi 0, %s48
      %s49 = sphi 0, %s46
      %s50 = sphi 0, %s49
      %s66 = sphi 0, %s50
      %s74 = sphi 0, %s76
      %s77 = sphi 0, %s74
      %s78 = sphi 0, %s77
      %s94 = sphi 0, %s78
      %s98 = sphi 0, %s98
      %s100 = sphi 0, %s98
      %s101 = sphi 0, %s100
      %s115 = sphi 0, %s101
      %s119 = sphi 0, %s119
      %s121 = sphi 0, %s119
      %s122 = sphi 0, %s121
      %s136 = sphi 0, %s122
      %s140 = sphi 0, %s140
      %s142 = sphi 0, %s140
      %s143 = sphi 0, %s142
      %s157 = sphi 0, %s143
      %s161 = sphi 0, %s161
      %s163 = sphi 0, %s161
      %s164 = sphi 0, %s163
      %s178 = sphi 0, %s164
      %s182 = sphi 0, %s182
      %s184 = sphi 0, %s182
      %s185 = sphi 0, %s184
      %s199 = sphi 0, %s185
      %s203 = sphi 0, %s203
      %s205 = sphi 0, %s203
      %s206 = sphi 0, %s205
      %s220 = sphi 0, %s206
      %s224 = sphi 0, %s224
      %s226 = sphi 0, %s224
      %s227 = sphi 0, %s226
      %s241 = sphi 0, %s227
      %s245 = sphi 0, %s245
      %s247 = sphi 0, %s245
      %s248 = sphi 0, %s247
      %s262 = sphi 0, %s248
      %s270 = sphi 0, %s272
      %s273 = sphi 0, %s270
      %s274 = sphi 0, %s273
      %s290 = sphi 0, %s274
      %s298 = sphi 0, %s300
      %s301 = sphi 0, %s298
      %s302 = sphi 0, %s301
      %s318 = sphi 0, %s302
      %s326 = sphi 0, %s328
      %s329 = sphi 0, %s326
      %s330 = sphi 0, %s329
      %s346 = sphi 0, %s330
    $region4: #{tpu_custom_call.1} parent=1 // loop_header_branch
      %25 = sbr.rel (%p23) target = $region8
    $region5: #{tpu_custom_call.1} parent=1 // loop_body
      %s27 = ssub.s32 %s22, 1
      %s28 = ssub.s32 %s22, 2
      %s35 = sadd.s32 1, %s30
      %p36 = scmp.ge.s32.totalorder %s35, 1
      %s37 = scalar_select %p36, 0, %s35
      %s38 = sadd.s32 1, %s29
      %s39 = scalar_select %p36, %s38, %s29
      %p40 = scmp.ge.s32.totalorder %s39, 2
      %s41 = scalar_select %p40, 0, %s39
      %s42 = ssub.s32 %s29, %s41
      %s43 = ssub.s32 %s30, %s37
      %s44 = sor.u32 %s42, %s43
      %p45 = scmp.eq.s32.totalorder %s44, 0
      %s47 = sadd.s32 %s46, 1
      %s48 = scalar_select %p45, %s46, %s47
      %p51 = pneg %p45
      %p52 = scmp.eq.s32.totalorder %s22, 1
      %p53 = por %p51, %p52
      %p54 = scmp.ne.s32.totalorder %s46, %s49
      %p55 = scmp.eq.s32.totalorder %s22, 0
      %p56 = por %p54, %p55
      %p57 = scmp.ne.s32.totalorder %s46, %s49
      %p58 = scmp.eq.s32.totalorder %s27, 1
      %p59 = por %p57, %p58
      %p60 = scmp.ne.s32.totalorder %s49, %s50
      %p61 = scmp.eq.s32.totalorder %s27, 0
      %p62 = por %p60, %p61
      %p63 = scmp.ne.s32.totalorder %s49, %s50
      %p64 = scmp.eq.s32.totalorder %s28, 1
      %p65 = por %p63, %p64
      %p67 = scmp.ne.s32.totalorder %s50, %s66
      %p68 = scmp.eq.s32.totalorder %s28, 0
      %p69 = por %p67, %p68
      %s70 = ssub.s32 %s29, %s41
      %s71 = ssub.s32 %s30, %s37
      %s72 = sor.u32 %s70, %s71
      %p73 = scmp.eq.s32.totalorder %s72, 0
      %s75 = sadd.s32 %s74, 1
      %s76 = scalar_select %p73, %s74, %s75
      %p79 = pneg %p73
      %p80 = scmp.eq.s32.totalorder %s22, 1
      %p81 = por %p79, %p80
      %p82 = scmp.ne.s32.totalorder %s74, %s77
      %p83 = scmp.eq.s32.totalorder %s22, 0
      %p84 = por %p82, %p83
      %p85 = scmp.ne.s32.totalorder %s74, %s77
      %p86 = scmp.eq.s32.totalorder %s27, 1
      %p87 = por %p85, %p86
      %p88 = scmp.ne.s32.totalorder %s77, %s78
      %p89 = scmp.eq.s32.totalorder %s27, 0
      %p90 = por %p88, %p89
      %p91 = scmp.ne.s32.totalorder %s77, %s78
      %p92 = scmp.eq.s32.totalorder %s28, 1
      %p93 = por %p91, %p92
      %p95 = scmp.ne.s32.totalorder %s78, %s94
      %p96 = scmp.eq.s32.totalorder %s28, 0
      %p97 = por %p95, %p96
      %s99 = sadd.s32 %s98, 1
      %p102 = scmp.eq.s32.totalorder %s22, 1
      %p103 = scmp.ne.s32.totalorder %s98, %s100
      %p104 = scmp.eq.s32.totalorder %s22, 0
      %p105 = por %p103, %p104
      %p106 = scmp.ne.s32.totalorder %s98, %s100
      %p107 = scmp.eq.s32.totalorder %s27, 1
      %p108 = por %p106, %p107
      %p109 = scmp.ne.s32.totalorder %s100, %s101
      %p110 = scmp.eq.s32.totalorder %s27, 0
      %p111 = por %p109, %p110
      %p112 = scmp.ne.s32.totalorder %s100, %s101
      %p113 = scmp.eq.s32.totalorder %s28, 1
      %p114 = por %p112, %p113
      %p116 = scmp.ne.s32.totalorder %s101, %s115
      %p117 = scmp.eq.s32.totalorder %s28, 0
      %p118 = por %p116, %p117
      %s120 = sadd.s32 %s119, 1
      %p123 = scmp.eq.s32.totalorder %s22, 1
      %p124 = scmp.ne.s32.totalorder %s119, %s121
      %p125 = scmp.eq.s32.totalorder %s22, 0
      %p126 = por %p124, %p125
      %p127 = scmp.ne.s32.totalorder %s119, %s121
      %p128 = scmp.eq.s32.totalorder %s27, 1
      %p129 = por %p127, %p128
      %p130 = scmp.ne.s32.totalorder %s121, %s122
      %p131 = scmp.eq.s32.totalorder %s27, 0
      %p132 = por %p130, %p131
      %p133 = scmp.ne.s32.totalorder %s121, %s122
      %p134 = scmp.eq.s32.totalorder %s28, 1
      %p135 = por %p133, %p134
      %p137 = scmp.ne.s32.totalorder %s122, %s136
      %p138 = scmp.eq.s32.totalorder %s28, 0
      %p139 = por %p137, %p138
      %s141 = sadd.s32 %s140, 1
      %p144 = scmp.eq.s32.totalorder %s22, 1
      %p145 = scmp.ne.s32.totalorder %s140, %s142
      %p146 = scmp.eq.s32.totalorder %s22, 0
      %p147 = por %p145, %p146
      %p148 = scmp.ne.s32.totalorder %s140, %s142
      %p149 = scmp.eq.s32.totalorder %s27, 1
      %p150 = por %p148, %p149
      %p151 = scmp.ne.s32.totalorder %s142, %s143
      %p152 = scmp.eq.s32.totalorder %s27, 0
      %p153 = por %p151, %p152
      %p154 = scmp.ne.s32.totalorder %s142, %s143
      %p155 = scmp.eq.s32.totalorder %s28, 1
      %p156 = por %p154, %p155
      %p158 = scmp.ne.s32.totalorder %s143, %s157
      %p159 = scmp.eq.s32.totalorder %s28, 0
      %p160 = por %p158, %p159
      %s162 = sadd.s32 %s161, 1
      %p165 = scmp.eq.s32.totalorder %s22, 1
      %p166 = scmp.ne.s32.totalorder %s161, %s163
      %p167 = scmp.eq.s32.totalorder %s22, 0
      %p168 = por %p166, %p167
      %p169 = scmp.ne.s32.totalorder %s161, %s163
      %p170 = scmp.eq.s32.totalorder %s27, 1
      %p171 = por %p169, %p170
      %p172 = scmp.ne.s32.totalorder %s163, %s164
      %p173 = scmp.eq.s32.totalorder %s27, 0
      %p174 = por %p172, %p173
      %p175 = scmp.ne.s32.totalorder %s163, %s164
      %p176 = scmp.eq.s32.totalorder %s28, 1
      %p177 = por %p175, %p176
      %p179 = scmp.ne.s32.totalorder %s164, %s178
      %p180 = scmp.eq.s32.totalorder %s28, 0
      %p181 = por %p179, %p180
      %s183 = sadd.s32 %s182, 1
      %p186 = scmp.eq.s32.totalorder %s22, 1
      %p187 = scmp.ne.s32.totalorder %s182, %s184
      %p188 = scmp.eq.s32.totalorder %s22, 0
      %p189 = por %p187, %p188
      %p190 = scmp.ne.s32.totalorder %s182, %s184
      %p191 = scmp.eq.s32.totalorder %s27, 1
      %p192 = por %p190, %p191
      %p193 = scmp.ne.s32.totalorder %s184, %s185
      %p194 = scmp.eq.s32.totalorder %s27, 0
      %p195 = por %p193, %p194
      %p196 = scmp.ne.s32.totalorder %s184, %s185
      %p197 = scmp.eq.s32.totalorder %s28, 1
      %p198 = por %p196, %p197
      %p200 = scmp.ne.s32.totalorder %s185, %s199
      %p201 = scmp.eq.s32.totalorder %s28, 0
      %p202 = por %p200, %p201
      %s204 = sadd.s32 %s203, 1
      %p207 = scmp.eq.s32.totalorder %s22, 1
      %p208 = scmp.ne.s32.totalorder %s203, %s205
      %p209 = scmp.eq.s32.totalorder %s22, 0
      %p210 = por %p208, %p209
      %p211 = scmp.ne.s32.totalorder %s203, %s205
      %p212 = scmp.eq.s32.totalorder %s27, 1
      %p213 = por %p211, %p212
      %p214 = scmp.ne.s32.totalorder %s205, %s206
      %p215 = scmp.eq.s32.totalorder %s27, 0
      %p216 = por %p214, %p215
      %p217 = scmp.ne.s32.totalorder %s205, %s206
      %p218 = scmp.eq.s32.totalorder %s28, 1
      %p219 = por %p217, %p218
      %p221 = scmp.ne.s32.totalorder %s206, %s220
      %p222 = scmp.eq.s32.totalorder %s28, 0
      %p223 = por %p221, %p222
      %s225 = sadd.s32 %s224, 1
      %p228 = scmp.eq.s32.totalorder %s22, 1
      %p229 = scmp.ne.s32.totalorder %s224, %s226
      %p230 = scmp.eq.s32.totalorder %s22, 0
      %p231 = por %p229, %p230
      %p232 = scmp.ne.s32.totalorder %s224, %s226
      %p233 = scmp.eq.s32.totalorder %s27, 1
      %p234 = por %p232, %p233
      %p235 = scmp.ne.s32.totalorder %s226, %s227
      %p236 = scmp.eq.s32.totalorder %s27, 0
      %p237 = por %p235, %p236
      %p238 = scmp.ne.s32.totalorder %s226, %s227
      %p239 = scmp.eq.s32.totalorder %s28, 1
      %p240 = por %p238, %p239
      %p242 = scmp.ne.s32.totalorder %s227, %s241
      %p243 = scmp.eq.s32.totalorder %s28, 0
      %p244 = por %p242, %p243
      %s246 = sadd.s32 %s245, 1
      %p249 = scmp.eq.s32.totalorder %s22, 1
      %p250 = scmp.ne.s32.totalorder %s245, %s247
      %p251 = scmp.eq.s32.totalorder %s22, 0
      %p252 = por %p250, %p251
      %p253 = scmp.ne.s32.totalorder %s245, %s247
      %p254 = scmp.eq.s32.totalorder %s27, 1
      %p255 = por %p253, %p254
      %p256 = scmp.ne.s32.totalorder %s247, %s248
      %p257 = scmp.eq.s32.totalorder %s27, 0
      %p258 = por %p256, %p257
      %p259 = scmp.ne.s32.totalorder %s247, %s248
      %p260 = scmp.eq.s32.totalorder %s28, 1
      %p261 = por %p259, %p260
      %p263 = scmp.ne.s32.totalorder %s248, %s262
      %p264 = scmp.eq.s32.totalorder %s28, 0
      %p265 = por %p263, %p264
      %s266 = ssub.s32 %s29, %s41
      %s267 = ssub.s32 %s30, %s37
      %s268 = sor.u32 %s266, %s267
      %p269 = scmp.eq.s32.totalorder %s268, 0
      %s271 = sadd.s32 %s270, 1
      %s272 = scalar_select %p269, %s270, %s271
      %p275 = pneg %p269
      %p276 = scmp.eq.s32.totalorder %s22, 1
      %p277 = por %p275, %p276
      %p278 = scmp.ne.s32.totalorder %s270, %s273
      %p279 = scmp.eq.s32.totalorder %s22, 0
      %p280 = por %p278, %p279
      %p281 = scmp.ne.s32.totalorder %s270, %s273
      %p282 = scmp.eq.s32.totalorder %s27, 1
      %p283 = por %p281, %p282
      %p284 = scmp.ne.s32.totalorder %s273, %s274
      %p285 = scmp.eq.s32.totalorder %s27, 0
      %p286 = por %p284, %p285
      %p287 = scmp.ne.s32.totalorder %s273, %s274
      %p288 = scmp.eq.s32.totalorder %s28, 1
      %p289 = por %p287, %p288
      %p291 = scmp.ne.s32.totalorder %s274, %s290
      %p292 = scmp.eq.s32.totalorder %s28, 0
      %p293 = por %p291, %p292
      %s294 = ssub.s32 %s29, %s41
      %s295 = ssub.s32 %s30, %s37
      %s296 = sor.u32 %s294, %s295
      %p297 = scmp.eq.s32.totalorder %s296, 0
      %s299 = sadd.s32 %s298, 1
      %s300 = scalar_select %p297, %s298, %s299
      %p303 = pneg %p297
      %p304 = scmp.eq.s32.totalorder %s22, 1
      %p305 = por %p303, %p304
      %p306 = scmp.ne.s32.totalorder %s298, %s301
      %p307 = scmp.eq.s32.totalorder %s22, 0
      %p308 = por %p306, %p307
      %p309 = scmp.ne.s32.totalorder %s298, %s301
      %p310 = scmp.eq.s32.totalorder %s27, 1
      %p311 = por %p309, %p310
      %p312 = scmp.ne.s32.totalorder %s301, %s302
      %p313 = scmp.eq.s32.totalorder %s27, 0
      %p314 = por %p312, %p313
      %p315 = scmp.ne.s32.totalorder %s301, %s302
      %p316 = scmp.eq.s32.totalorder %s28, 1
      %p317 = por %p315, %p316
      %p319 = scmp.ne.s32.totalorder %s302, %s318
      %p320 = scmp.eq.s32.totalorder %s28, 0
      %p321 = por %p319, %p320
      %s322 = ssub.s32 %s29, %s41
      %s323 = ssub.s32 %s30, %s37
      %s324 = sor.u32 %s322, %s323
      %p325 = scmp.eq.s32.totalorder %s324, 0
      %s327 = sadd.s32 %s326, 1
      %s328 = scalar_select %p325, %s326, %s327
      %p331 = pneg %p325
      %p332 = scmp.eq.s32.totalorder %s22, 1
      %p333 = por %p331, %p332
      %p334 = scmp.ne.s32.totalorder %s326, %s329
      %p335 = scmp.eq.s32.totalorder %s22, 0
      %p336 = por %p334, %p335
      %p337 = scmp.ne.s32.totalorder %s326, %s329
      %p338 = scmp.eq.s32.totalorder %s27, 1
      %p339 = por %p337, %p338
      %p340 = scmp.ne.s32.totalorder %s329, %s330
      %p341 = scmp.eq.s32.totalorder %s27, 0
      %p342 = por %p340, %p341
      %p343 = scmp.ne.s32.totalorder %s329, %s330
      %p344 = scmp.eq.s32.totalorder %s28, 1
      %p345 = por %p343, %p344
      %p347 = scmp.ne.s32.totalorder %s330, %s346
      %p348 = scmp.eq.s32.totalorder %s28, 0
      %p349 = por %p347, %p348
      %p350 = scmp.le.s32.totalorder 1, %s22
      %p351 = scmp.lt.s32.totalorder %s22, 3
      %p352 = pnand %p350, %p351
      %p353 = pneg %p352
      // Predicated region
      $region9: #{tpu_custom_call.1} parent=5 // pred_check
        _
      $region10: #{tpu_custom_call.1} parent=5 // pred_check_branch
        %355 = sbr.rel (%p352) target = $region12
      $region11: #{tpu_custom_call.1} parent=5 // pred_region
        %s356 = ssub.s32 %s22, 1
        // Predicated region
        $region13: #{tpu_custom_call.1} parent=11 // pred_check
          %p357 = pneg %p111
        $region14: #{tpu_custom_call.1} parent=11 // pred_check_branch
          %359 = sbr.rel (%p357) target = $region16
        $region15: #{tpu_custom_call.1} parent=11 // pred_region
          _
        $region16: #{tpu_custom_call.1} parent=11 // pred_fallthru
          _
        // Predicated region
        $region17: #{tpu_custom_call.1} parent=11 // pred_check
          %p360 = pneg %p132
        $region18: #{tpu_custom_call.1} parent=11 // pred_check_branch
          %362 = sbr.rel (%p360) target = $region20
        $region19: #{tpu_custom_call.1} parent=11 // pred_region
          _
        $region20: #{tpu_custom_call.1} parent=11 // pred_fallthru
          _
        // Predicated region
        $region21: #{tpu_custom_call.1} parent=11 // pred_check
          %p363 = pneg %p153
        $region22: #{tpu_custom_call.1} parent=11 // pred_check_branch
          %365 = sbr.rel (%p363) target = $region24
        $region23: #{tpu_custom_call.1} parent=11 // pred_region
          _
        $region24: #{tpu_custom_call.1} parent=11 // pred_fallthru
          _
        // Predicated region
        $region25: #{tpu_custom_call.1} parent=11 // pred_check
          %p366 = pneg %p174
        $region26: #{tpu_custom_call.1} parent=11 // pred_check_branch
          %368 = sbr.rel (%p366) target = $region28
        $region27: #{tpu_custom_call.1} parent=11 // pred_region
          _
        $region28: #{tpu_custom_call.1} parent=11 // pred_fallthru
          _
        // Predicated region
        $region29: #{tpu_custom_call.1} parent=11 // pred_check
          %p369 = pneg %p195
        $region30: #{tpu_custom_call.1} parent=11 // pred_check_branch
          %371 = sbr.rel (%p369) target = $region32
        $region31: #{tpu_custom_call.1} parent=11 // pred_region
          _
        $region32: #{tpu_custom_call.1} parent=11 // pred_fallthru
          _
        // Predicated region
        $region33: #{tpu_custom_call.1} parent=11 // pred_check
          %p372 = pneg %p216
        $region34: #{tpu_custom_call.1} parent=11 // pred_check_branch
          %374 = sbr.rel (%p372) target = $region36
        $region35: #{tpu_custom_call.1} parent=11 // pred_region
          _
        $region36: #{tpu_custom_call.1} parent=11 // pred_fallthru
          _
        // Predicated region
        $region37: #{tpu_custom_call.1} parent=11 // pred_check
          %p375 = pneg %p237
        $region38: #{tpu_custom_call.1} parent=11 // pred_check_branch
          %377 = sbr.rel (%p375) target = $region40
        $region39: #{tpu_custom_call.1} parent=11 // pred_region
          _
        $region40: #{tpu_custom_call.1} parent=11 // pred_fallthru
          _
        // Predicated region
        $region41: #{tpu_custom_call.1} parent=11 // pred_check
          %p378 = pneg %p258
        $region42: #{tpu_custom_call.1} parent=11 // pred_check_branch
          %380 = sbr.rel (%p378) target = $region44
        $region43: #{tpu_custom_call.1} parent=11 // pred_region
          _
        $region44: #{tpu_custom_call.1} parent=11 // pred_fallthru
          _
      $region12: #{tpu_custom_call.1} parent=5 // pred_fallthru
        _
      %p381 = scmp.lt.s32.totalorder %s22, 2
      // Predicated region
      $region45: #{tpu_custom_call.1} parent=5 // pred_check
        %p382 = pneg %p381
      $region46: #{tpu_custom_call.1} parent=5 // pred_check_branch
        %384 = sbr.rel (%p382) target = $region48
      $region47: #{tpu_custom_call.1} parent=5 // pred_region
        // Predicated region
        $region49: #{tpu_custom_call.1} parent=47 // pred_check
          %p385 = pneg %p56
        $region50: #{tpu_custom_call.1} parent=47 // pred_check_branch
          %387 = sbr.rel (%p385) target = $region52
        $region51: #{tpu_custom_call.1} parent=47 // pred_region
          %p388 = scmp.lt.s32.totalorder %s29, 1
          %s389 = scalar_select %p388, %s29, 1
          %p390 = scmp.lt.s32.totalorder %s30, 0
          %s391 = scalar_select %p390, %s30, 0
          %s392 = sadd.s32 %s391, %s389
          %s393 = smul.addr %s392, 4
          %s394 = scalar_lea.vmem %s0, %s393
        $region52: #{tpu_custom_call.1} parent=47 // pred_fallthru
          _
        // Predicated region
        $region53: #{tpu_custom_call.1} parent=47 // pred_check
          %p395 = pneg %p84
        $region54: #{tpu_custom_call.1} parent=47 // pred_check_branch
          %397 = sbr.rel (%p395) target = $region56
        $region55: #{tpu_custom_call.1} parent=47 // pred_region
          %p398 = scmp.lt.s32.totalorder %s29, 1
          %s399 = scalar_select %p398, %s29, 1
          %p400 = scmp.lt.s32.totalorder %s30, 0
          %s401 = scalar_select %p400, %s30, 0
          %s402 = smul.addr %s399, 4
          %s403 = sadd.s32 %s401, %s402
          %s404 = smul.addr %s403, 8
          %s405 = scalar_lea.vmem %s1, %s404
        $region56: #{tpu_custom_call.1} parent=47 // pred_fallthru
          _
      $region48: #{tpu_custom_call.1} parent=5 // pred_fallthru
        _
      %p406 = scmp.le.s32.totalorder 1, %s22
      %p407 = scmp.lt.s32.totalorder %s22, 3
      %p408 = pnand %p406, %p407
      %p409 = pneg %p408
      // Predicated region
      $region57: #{tpu_custom_call.1} parent=5 // pred_check
        _
      $region58: #{tpu_custom_call.1} parent=5 // pred_check_branch
        %411 = sbr.rel (%p408) target = $region60
      $region59: #{tpu_custom_call.1} parent=5 // pred_region
        %s412 = ssub.s32 %s22, 1
        %p413 = scmp.lt.s32.totalorder %s31, 1
        %s414 = scalar_select %p413, %s31, 1
        %p415 = scmp.lt.s32.totalorder %s32, 0
        %s416 = scalar_select %p415, %s32, 0
        %s417 = sadd.s32 %s416, %s414
        %s418 = smul.addr %s417, 4
        %s419 = scalar_lea.vmem %s0, %s418
        %p420 = pneg %p62
        %p421 = pneg %p59
        %p422 = scmp.lt.s32.totalorder %s31, 1
        %s423 = scalar_select %p422, %s31, 1
        %p424 = scmp.lt.s32.totalorder %s32, 0
        %s425 = scalar_select %p424, %s32, 0
        %s426 = smul.addr %s423, 4
        %s427 = sadd.s32 %s425, %s426
        %s428 = smul.addr %s427, 8
        %s429 = scalar_lea.vmem %s1, %s428
        %p430 = pneg %p90
        %p431 = pneg %p87
        %p432 = pneg %p111
        %p433 = pneg %p108
        %p434 = pneg %p132
        %p435 = pneg %p129
        %p436 = pneg %p153
        %p437 = pneg %p150
        %p438 = pneg %p174
        %p439 = pneg %p171
        %p440 = pneg %p195
        %p441 = pneg %p192
        %p442 = pneg %p216
        %p443 = pneg %p213
        %p444 = pneg %p237
        %p445 = pneg %p234
        %p446 = pneg %p258
        %p447 = pneg %p255
        %p448 = pneg %p286
        %p449 = pneg %p283
        %p450 = scmp.lt.s32.totalorder %s31, 1
        %s451 = scalar_select %p450, %s31, 1
        %p452 = scmp.lt.s32.totalorder %s32, 0
        %s453 = scalar_select %p452, %s32, 0
        %s454 = sadd.s32 %s453, %s451
        %s455 = smul.addr %s454, 4
        %s456 = scalar_lea.vmem %s10, %s455
        %p457 = pneg %p314
        %p458 = pneg %p311
        %s459 = sand.u32 %s301, 1
        %s460 = scalar_lea.sflag [#allocation3], %s459
        %s461 = sand.u32 %s301, 1
        %s462 = smul.addr %s461, 32
        %s463 = scalar_lea.vmem [#allocation2], %s462
        %p464 = pneg %p342
        %p465 = pneg %p339
        %p466 = scmp.lt.s32.totalorder %s31, 1
        %s467 = scalar_select %p466, %s31, 1
        %p468 = scmp.lt.s32.totalorder %s32, 0
        %s469 = scalar_select %p468, %s32, 0
        %s470 = sadd.s32 %s469, %s467
        %s471 = smul.addr %s470, 4
        %s472 = scalar_lea.vmem %s12, %s471
        %p473 = scmp.lt.s32.totalorder %s31, 1
        %s474 = scalar_select %p473, %s31, 1
        %p475 = scmp.lt.s32.totalorder %s32, 0
        %s476 = scalar_select %p475, %s32, 0
        %s477 = sadd.s32 %s476, %s474
        %s478 = smul.addr %s477, 4
        %s479 = scalar_lea.vmem %s0, %s478
        %p480 = scmp.lt.s32.totalorder %s31, 1
        %s481 = scalar_select %p480, %s31, 1
        %p482 = scmp.lt.s32.totalorder %s32, 0
        %s483 = scalar_select %p482, %s32, 0
        %s484 = smul.addr %s481, 4
        %s485 = sadd.s32 %s483, %s484
        %s486 = smul.addr %s485, 8
        %s487 = scalar_lea.vmem %s1, %s486
        %p488 = scmp.lt.s32.totalorder %s31, 1
        %s489 = scalar_select %p488, %s31, 1
        %p490 = scmp.lt.s32.totalorder %s32, 0
        %s491 = scalar_select %p490, %s32, 0
        %s492 = sadd.s32 %s491, %s489
        %s493 = smul.addr %s492, 4
        %s494 = scalar_lea.vmem %s10, %s493
        %p495 = scmp.lt.s32.totalorder %s31, 1
        %s496 = scalar_select %p495, %s31, 1
        %p497 = scmp.lt.s32.totalorder %s32, 0
        %s498 = scalar_select %p497, %s32, 0
        %s499 = sadd.s32 %s498, %s496
        %s500 = smul.addr %s499, 4
        %s501 = scalar_lea.vmem %s12, %s500
        %v502 = vld [vmem:[%s487] sm:$0xff]
        %v503 = vld [vmem:[%s487 + $0x8] sm:$0xff]
        %v504 = vld [vmem:[%s487 + $0x10] sm:$0xff]
        %v505 = vld [vmem:[%s487 + $0x18] sm:$0xff]
        %v506 = vld [vmem:[%s479] sm:$0x7]
        %v507 = vld [vmem:[%s2] sm:$0xff]
        %v508 = vld [vmem:[%s2 + $0x8] sm:$0xff]
        %v509 = vld [vmem:[%s3] sm:$0xff]
        %v510 = vld [vmem:[%s3 + $0x8] sm:$0xff]
        %512 = vset.pattern.permute.xlu0 0
        %513 = vperm.xlu0 %512, %v509
        %v514 = vpop.permute.xlu0 %513
        %517 = vset.pattern.permute.xlu0 0
        %518 = vperm.xlu0 %517, %v510
        %v519 = vpop.permute.xlu0 %518
        %vm521 = vcmask 261120
        %v523 = vsel %vm521, %v507, 0
        %v526 = vsel %vm521, %v508, 0
        %528 = vmatpush.msra.mxu0 0.0
        %529 = vmatpush.msra.mxu0 0.0
        %530 = vmatpush.msra.mxu0 0.0
        %531 = vmatpush.msra.mxu0 0.0
        %532 = vmatpush.msra.mxu0 0.0
        %533 = vmatpush.msra.mxu0 0.0
        %534 = vmatpush.msra.mxu0 0.0
        %535 = vmatpush.msra.mxu0 0.0
        %536 = vmatpush.msra.mxu0 0.0
        %537 = vmatpush.msra.mxu0 0.0
        %538 = vmatpush.msra.mxu0 0.0
        %539 = vmatpush.msra.mxu0 0.0
        %540 = vmatpush.msra.mxu0 %v505
        %541 = vmatpush.msra.mxu0 %v504
        %542 = vmatpush.msra.mxu0 %v503
        %543 = vmatpush.msra.mxu0 %v502
        %544 = vmatmul.f32.gmra.mxu0 %v523
        %v545 = vpop.f32.mrf.mxu0
        %v546 = vadd.f32 %v514, %v545
        %547 = vmatmul.f32.gmra.mxu0 %v526
        %v548 = vpop.f32.mrf.mxu0
        %v549 = vadd.f32 %v519, %v548
        %550 = vdwg.mxu0
        %v551 = vmax.f32 %v546, 0.0
        %v552 = vmax.f32 %v549, 0.0
        %v553 = vld [vmem:[%s4] sm:$0xff]
        %v554 = vld [vmem:[%s4 + $0x8] sm:$0xff]
        %v555 = vld [vmem:[%s5] sm:$0xff]
        %v556 = vld [vmem:[%s5 + $0x8] sm:$0xff]
        %558 = vset.pattern.permute.xlu0 0
        %559 = vperm.xlu0 %558, %v555
        %v560 = vpop.permute.xlu0 %559
        %563 = vset.pattern.permute.xlu0 0
        %564 = vperm.xlu0 %563, %v556
        %v565 = vpop.permute.xlu0 %564
        %vm567 = vcmask 130048
        %v569 = vsel %vm567, %v553, 0
        %v572 = vsel %vm567, %v554, 0
        %574 = vmatpush.msra.mxu0 0.0
        %575 = vmatpush.msra.mxu0 0.0
        %576 = vmatpush.msra.mxu0 0.0
        %577 = vmatpush.msra.mxu0 0.0
        %578 = vmatpush.msra.mxu0 0.0
        %579 = vmatpush.msra.mxu0 0.0
        %580 = vmatpush.msra.mxu0 0.0
        %581 = vmatpush.msra.mxu0 0.0
        %582 = vmatpush.msra.mxu0 0.0
        %583 = vmatpush.msra.mxu0 0.0
        %584 = vmatpush.msra.mxu0 0.0
        %585 = vmatpush.msra.mxu0 0.0
        %586 = vmatpush.msra.mxu0 0.0
        %587 = vmatpush.msra.mxu0 0.0
        %588 = vmatpush.msra.mxu0 %v552
        %589 = vmatpush.msra.mxu0 %v551
        %590 = vmatmul.f32.gmra.mxu0 %v569
        %v591 = vpop.f32.mrf.mxu0
        %v592 = vadd.f32 %v560, %v591
        %593 = vmatmul.f32.gmra.mxu0 %v572
        %v594 = vpop.f32.mrf.mxu0
        %v595 = vadd.f32 %v565, %v594
        %596 = vdwg.mxu0
        %v597 = vmax.f32 %v592, 0.0
        %v598 = vmax.f32 %v595, 0.0
        %v599 = vld [vmem:[%s6] sm:$0x7]
        %v600 = vld [vmem:[%s7] sm:$0x7]
        %602 = vset.pattern.permute.xlu0 0
        %603 = vperm.xlu0 %602, %v600
        %v604 = vpop.permute.xlu0 %603
        %v607 = vsel %vm567, %v599, 0
        %609 = vmatpush.msra.mxu0 0.0
        %610 = vmatpush.msra.mxu0 0.0
        %611 = vmatpush.msra.mxu0 0.0
        %612 = vmatpush.msra.mxu0 0.0
        %613 = vmatpush.msra.mxu0 0.0
        %614 = vmatpush.msra.mxu0 0.0
        %615 = vmatpush.msra.mxu0 0.0
        %616 = vmatpush.msra.mxu0 0.0
        %617 = vmatpush.msra.mxu0 0.0
        %618 = vmatpush.msra.mxu0 0.0
        %619 = vmatpush.msra.mxu0 0.0
        %620 = vmatpush.msra.mxu0 0.0
        %621 = vmatpush.msra.mxu0 0.0
        %622 = vmatpush.msra.mxu0 0.0
        %623 = vmatpush.msra.mxu0 %v598
        %624 = vmatpush.msra.mxu0 %v597
        %625 = vmatmul.f32.gmra.mxu0 %v607
        %v626 = vpop.f32.mrf.mxu0
        %v627 = vadd.f32 %v604, %v626
        %628 = vdwg.mxu0
        %v629 = vld [vmem:[%s8] sm:$0xff]
        %v630 = vld [vmem:[%s8 + $0x8] sm:$0xff]
        %v631 = vld [vmem:[%s8 + $0x10] sm:$0xff]
        %v632 = vld [vmem:[%s8 + $0x18] sm:$0xff]
        %v633 = vld [vmem:[%s9] sm:$0xff]
        %v634 = vld [vmem:[%s9 + $0x8] sm:$0xff]
        %v635 = vld [vmem:[%s9 + $0x10] sm:$0xff]
        %v636 = vld [vmem:[%s9 + $0x18] sm:$0xff]
        %638 = vset.pattern.permute.xlu0 0
        %639 = vperm.xlu0 %638, %v633
        %v640 = vpop.permute.xlu0 %639
        %643 = vset.pattern.permute.xlu0 0
        %644 = vperm.xlu0 %643, %v634
        %v645 = vpop.permute.xlu0 %644
        %648 = vset.pattern.permute.xlu0 0
        %649 = vperm.xlu0 %648, %v635
        %v650 = vpop.permute.xlu0 %649
        %653 = vset.pattern.permute.xlu0 0
        %654 = vperm.xlu0 %653, %v636
        %v655 = vpop.permute.xlu0 %654
        %v658 = vsel %vm567, %v629, 0
        %v661 = vsel %vm567, %v630, 0
        %v664 = vsel %vm567, %v631, 0
        %v667 = vsel %vm567, %v632, 0
        %669 = vmatpush.msra.mxu0 0.0
        %670 = vmatpush.msra.mxu0 0.0
        %671 = vmatpush.msra.mxu0 0.0
        %672 = vmatpush.msra.mxu0 0.0
        %673 = vmatpush.msra.mxu0 0.0
        %674 = vmatpush.msra.mxu0 0.0
        %675 = vmatpush.msra.mxu0 0.0
        %676 = vmatpush.msra.mxu0 0.0
        %677 = vmatpush.msra.mxu0 0.0
        %678 = vmatpush.msra.mxu0 0.0
        %679 = vmatpush.msra.mxu0 0.0
        %680 = vmatpush.msra.mxu0 0.0
        %681 = vmatpush.msra.mxu0 0.0
        %682 = vmatpush.msra.mxu0 0.0
        %683 = vmatpush.msra.mxu0 %v598
        %684 = vmatpush.msra.mxu0 %v597
        %685 = vmatmul.f32.gmra.mxu0 %v658
        %v686 = vpop.f32.mrf.mxu0
        %v687 = vadd.f32 %v640, %v686
        %688 = vmatmul.f32.gmra.mxu0 %v661
        %v689 = vpop.f32.mrf.mxu0
        %v690 = vadd.f32 %v645, %v689
        %691 = vmatmul.f32.gmra.mxu0 %v664
        %v692 = vpop.f32.mrf.mxu0
        %v693 = vadd.f32 %v650, %v692
        %694 = vmatmul.f32.gmra.mxu0 %v667
        %v695 = vpop.f32.mrf.mxu0
        %v696 = vadd.f32 %v655, %v695
        %697 = vdwg.mxu0
        %v698 = vadd.f32 %v506, %v627
        %699 = vst [vmem:[%s494] sm:$0x7] %v698
        %700 = vst [vmem:[%s501] sm:$0x7] %v627
        %v701 = vadd.f32 %v502, %v687
        %v702 = vadd.f32 %v503, %v690
        %v703 = vadd.f32 %v504, %v693
        %v704 = vadd.f32 %v505, %v696
        %v705 = vmul.f32 %v701, %v701
        %v706 = vmul.f32 %v702, %v702
        %v707 = vmul.f32 %v703, %v703
        %v708 = vmul.f32 %v704, %v704
        %v709 = vadd.f32 %v705, %v706
        %v710 = vadd.f32 %v709, %v707
        %v711 = vadd.f32 %v710, %v708
        %v712 = vrot.slane %v711, 4
        %v713 = vadd.f32 %v711, %v712
        %v714 = vrot.slane %v713, 2
        %v715 = vadd.f32 %v713, %v714
        %v716 = vrot.slane %v715, 1
        %v717 = vadd.f32 %v715, %v716
        %v718 = vrsqrt.pop %v717
        %v719 = vmul.f32 %v718, %v717
        %v720 = vmul.f32 %v719, %v718
        %v721 = vmul.f32 0.5, %v720
        %v722 = vsub.f32 1.5, %v721
        %v723 = vmul.f32 %v718, %v722
        %vm724 = vweird.f32 %v717
        %vm725 = vweird.f32 %v718
        %vm726 = vmor %vm724, %vm725
        %v727 = vsel %vm726, %v718, %v723
        %v728 = vmul.f32 %v701, %v727
        %v729 = vmul.f32 %v702, %v727
        %v730 = vmul.f32 %v703, %v727
        %v731 = vmul.f32 %v704, %v727
        %732 = vst [vmem:[%s463] sm:$0xff] %v728
        %733 = vst [vmem:[%s463 + $0x8] sm:$0xff] %v729
        %734 = vst [vmem:[%s463 + $0x10] sm:$0xff] %v730
        %735 = vst [vmem:[%s463 + $0x18] sm:$0xff] %v731
        %p736 = scmp.lt.s32.totalorder %s31, 1
        %s737 = scalar_select %p736, %s31, 1
        %p738 = scmp.lt.s32.totalorder %s32, 0
        %s739 = scalar_select %p738, %s32, 0
        %s740 = sadd.s32 %s739, %s737
        %s741 = smul.addr %s740, 4
        %s742 = scalar_lea.vmem %s10, %s741
        %s743 = sand.u32 %s301, 1
        %s744 = scalar_lea.sflag [#allocation3], %s743
        %s745 = sand.u32 %s301, 1
        %s746 = smul.addr %s745, 32
        %s747 = scalar_lea.vmem [#allocation2], %s746
        %p748 = scmp.lt.s32.totalorder %s31, 1
        %s749 = scalar_select %p748, %s31, 1
        %p750 = scmp.lt.s32.totalorder %s32, 0
        %s751 = scalar_select %p750, %s32, 0
        %s752 = sadd.s32 %s751, %s749
        %s753 = smul.addr %s752, 4
        %s754 = scalar_lea.vmem %s12, %s753
        // Predicated region
        $region61: #{tpu_custom_call.1} parent=59 // pred_check
          %p755 = pneg %p283
        $region62: #{tpu_custom_call.1} parent=59 // pred_check_branch
          %757 = sbr.rel (%p755) target = $region64
        $region63: #{tpu_custom_call.1} parent=59 // pred_region
          _
        $region64: #{tpu_custom_call.1} parent=59 // pred_fallthru
          _
        // Predicated region
        $region65: #{tpu_custom_call.1} parent=59 // pred_check
          %p758 = pneg %p311
        $region66: #{tpu_custom_call.1} parent=59 // pred_check_branch
          %760 = sbr.rel (%p758) target = $region68
        $region67: #{tpu_custom_call.1} parent=59 // pred_region
          %762 = vsyncadd %s744, 0
          %s763 = smul.addr %s31, 4
          %s764 = sadd.s32 %s32, %s763
          %s765 = smul.addr %s764, 8
          %s766 = scalar_lea.hbm %s11, %s765
          %s767 = sshll.u32 %s747, 4
          %s768 = int_to_ptr.vmem [resolvable:$true] %s767
          %s769 = sshll.u32 %s766, 4
          %s770 = int_to_ptr.hbm [resolvable:$true] %s769
          %775 = dma.vmem_to_hbm [thread:$0]  %s768, 512, %s770, %s744, 128, 128, 8
        $region68: #{tpu_custom_call.1} parent=59 // pred_fallthru
          _
        // Predicated region
        $region69: #{tpu_custom_call.1} parent=59 // pred_check
          %p776 = pneg %p339
        $region70: #{tpu_custom_call.1} parent=59 // pred_check_branch
          %778 = sbr.rel (%p776) target = $region72
        $region71: #{tpu_custom_call.1} parent=59 // pred_region
          _
        $region72: #{tpu_custom_call.1} parent=59 // pred_fallthru
          _
      $region60: #{tpu_custom_call.1} parent=5 // pred_fallthru
        _
      %p779 = scmp.le.s32.totalorder 2, %s22
      // Predicated region
      $region73: #{tpu_custom_call.1} parent=5 // pred_check
        %p780 = pneg %p779
      $region74: #{tpu_custom_call.1} parent=5 // pred_check_branch
        %782 = sbr.rel (%p780) target = $region76
      $region75: #{tpu_custom_call.1} parent=5 // pred_region
        %s783 = ssub.s32 %s22, 2
        // Predicated region
        $region77: #{tpu_custom_call.1} parent=75 // pred_check
          %p784 = pneg %p289
        $region78: #{tpu_custom_call.1} parent=75 // pred_check_branch
          %786 = sbr.rel (%p784) target = $region80
        $region79: #{tpu_custom_call.1} parent=75 // pred_region
          %p787 = scmp.lt.s32.totalorder %s33, 1
          %s788 = scalar_select %p787, %s33, 1
          %p789 = scmp.lt.s32.totalorder %s34, 0
          %s790 = scalar_select %p789, %s34, 0
          %s791 = sadd.s32 %s790, %s788
          %s792 = smul.addr %s791, 4
          %s793 = scalar_lea.vmem %s10, %s792
        $region80: #{tpu_custom_call.1} parent=75 // pred_fallthru
          _
        // Predicated region
        $region81: #{tpu_custom_call.1} parent=75 // pred_check
          %p794 = pneg %p317
        $region82: #{tpu_custom_call.1} parent=75 // pred_check_branch
          %796 = sbr.rel (%p794) target = $region84
        $region83: #{tpu_custom_call.1} parent=75 // pred_region
          %s797 = sand.u32 %s302, 1
          %s798 = scalar_lea.sflag [#allocation3], %s797
          %s799 = sand.u32 %s302, 1
          %s800 = smul.addr %s799, 32
          %s801 = scalar_lea.vmem [#allocation2], %s800
          %803 = dma.done %s798, 512
        $region84: #{tpu_custom_call.1} parent=75 // pred_fallthru
          _
        // Predicated region
        $region85: #{tpu_custom_call.1} parent=75 // pred_check
          %p804 = pneg %p345
        $region86: #{tpu_custom_call.1} parent=75 // pred_check_branch
          %806 = sbr.rel (%p804) target = $region88
        $region87: #{tpu_custom_call.1} parent=75 // pred_region
          %p807 = scmp.lt.s32.totalorder %s33, 1
          %s808 = scalar_select %p807, %s33, 1
          %p809 = scmp.lt.s32.totalorder %s34, 0
          %s810 = scalar_select %p809, %s34, 0
          %s811 = sadd.s32 %s810, %s808
          %s812 = smul.addr %s811, 4
          %s813 = scalar_lea.vmem %s12, %s812
        $region88: #{tpu_custom_call.1} parent=75 // pred_fallthru
          _
      $region76: #{tpu_custom_call.1} parent=5 // pred_fallthru
        _
    $region6: #{tpu_custom_call.1} parent=1 // loop_footer
      %s26 = sadd.s32 1, %s22
    $region7: #{tpu_custom_call.1} parent=1 // loop_footer_branch
      %21 = sbr.rel target = $region3
    $region8: #{tpu_custom_call.1} parent=1 // loop_exit
      _
    %814 = vsyncpa [#allocation3], 1
    %s815 = scalar_lea.sflag [#allocation3], 1
    %816 = vsyncpa %s815, 1

</llo_original>
